<compile_context>
chip_gen: v5e
topology: v5e:2x2
jax: 0.10.0
libtpu: 0.0.40
codegen_flags: <defaults>
</compile_context>

<pallas_src>
import functools

import jax
import jax.numpy as jnp
from jax.experimental import pallas as pl
from jax.experimental.pallas import tpu as pltpu


def _round_up(x, m):
    return ((x + m - 1) // m) * m


def _ann_kernel(xT_ref, w1_ref, b1_ref, w2_ref, b2_ref, w3_ref, b3_ref, o_ref):
    """Fused 3-layer MLP, batch-on-lanes layout.

    xT_ref : (8,  TB) float32   (input tile, batch on lanes)
    w1_ref : (16, 8)  float32   b1_ref : (16, 1)
    w2_ref : (16, 16) float32   b2_ref : (16, 1)
    w3_ref : (1,  16) float32   b3_ref : (1, 1) in SMEM (scalar)
    o_ref  : (1,  TB) float32   (lane-dense output tile)
    """
    xT = xT_ref[...]                                             # (8, TB)

    # Layer 1: h1 = relu(W1 @ x + b1)                            -> (16, TB)
    h1 = jnp.dot(w1_ref[...], xT, preferred_element_type=jnp.float32)
    h1 = jnp.maximum(h1 + b1_ref[...], 0.0)

    # Layer 2: h2 = relu(W2 @ h1 + b2)                           -> (16, TB)
    h2 = jnp.dot(w2_ref[...], h1, preferred_element_type=jnp.float32)
    h2 = jnp.maximum(h2 + b2_ref[...], 0.0)

    # Layer 3: h3 = W3 @ h2 + b3                                 -> (1, TB)
    h3 = jnp.dot(w3_ref[...], h2, preferred_element_type=jnp.float32)
    h3 = h3 + b3_ref[0, 0]

    # Numerically-stable sigmoid (EUP exp; no overflow for very negative h3).
    z = jnp.exp(-jnp.abs(h3))
    o_ref[...] = jnp.where(h3 >= 0.0, 1.0 / (1.0 + z), z / (1.0 + z))


@functools.partial(jax.jit, static_argnames=("tb",))
def ann_forward(x, params, *, tb=4096):
    """Fused ANN forward pass.

    x      : (B, 8) float32
    params : dict with PyTorch-layout weights
             w1 (16,8), b1 (16,1), w2 (16,16), b2 (16,1), w3 (1,16), b3 (1,1)
    returns: (B, 1) float32
    """
    B = x.shape[0]

    # Lane-dense batch tile (multiple of 128), capped so tiny batches work.
    tb = min(tb, _round_up(B, 128))
    Bp = _round_up(B, tb)
    n_tiles = Bp // tb

    # Put the batch on the lane axis; pad only if not already tile-aligned
    # (pad + transpose fuse into a single XLA copy pass over x).
    xT = x.T                                                     # (8, B)
    if Bp != B:
        xT = jnp.pad(xT, ((0, 0), (0, Bp - B)))                  # (8, Bp)

    grid_spec = pltpu.PrefetchScalarGridSpec(
        num_scalar_prefetch=0,
        grid=(n_tiles,),
        in_specs=[
            pl.BlockSpec((8, tb), lambda i: (0, i)),             # xT (streamed)
            pl.BlockSpec((16, 8), lambda i: (0, 0)),             # w1 (resident)
            pl.BlockSpec((16, 1), lambda i: (0, 0)),             # b1
            pl.BlockSpec((16, 16), lambda i: (0, 0)),            # w2
            pl.BlockSpec((16, 1), lambda i: (0, 0)),             # b2
            pl.BlockSpec((1, 16), lambda i: (0, 0)),             # w3
            pl.BlockSpec(memory_space=pltpu.MemorySpace.SMEM),   # b3 scalar
        ],
        out_specs=pl.BlockSpec((1, tb), lambda i: (0, i)),       # lane-dense out
    )

    out_T = pl.pallas_call(
        _ann_kernel,
        out_shape=jax.ShapeDtypeStruct((1, Bp), jnp.float32),
        grid_spec=grid_spec,
        compiler_params=pltpu.CompilerParams(
            dimension_semantics=("parallel",),
        ),
    )(xT, params["w1"], params["b1"], params["w2"], params["b2"],
      params["w3"], params["b3"])

    return out_T.T[:B, :]                                        # (B, 1)


def init_params(key):
    """PyTorch-default-style init, stored in PyTorch (out, in) layout;
    biases as (out, 1) columns for the batch-on-lanes kernel."""
    def linear_init(k, fan_in, fan_out):
        kw, kb = jax.random.split(k)
        bound = 1.0 / jnp.sqrt(jnp.float32(fan_in))
        w = jax.random.uniform(kw, (fan_out, fan_in), jnp.float32, -bound, bound)
        b = jax.random.uniform(kb, (fan_out, 1), jnp.float32, -bound, bound)
        return w, b

    k1, k2, k3 = jax.random.split(key, 3)
    w1, b1 = linear_init(k1, 8, 16)
    w2, b2 = linear_init(k2, 16, 16)
    w3, b3 = linear_init(k3, 16, 1)
    return {"w1": w1, "b1": b1, "w2": w2, "b2": b2, "w3": w3, "b3": b3}


def ann_forward_ref(x, p):
    """Pure-JAX reference (PyTorch semantics)."""
    h1 = jnp.maximum(x @ p["w1"].T + p["b1"][:, 0], 0.0)
    h2 = jnp.maximum(h1 @ p["w2"].T + p["b2"][:, 0], 0.0)
    return jax.nn.sigmoid(h2 @ p["w3"].T + p["b3"][:, 0])


if __name__ == "__main__":
    key = jax.random.PRNGKey(0)
    k_params, k_x1, k_x2 = jax.random.split(key, 3)

    params = init_params(k_params)

    # Small case consistent with the module spec: batch=2, in_features=8.
    x_small = jax.random.normal(k_x1, (2, 8), dtype=jnp.float32)
    out_small = jax.block_until_ready(ann_forward(x_small, params))
    ref_small = ann_forward_ref(x_small, params)
    assert out_small.shape == (2, 1)
    assert jnp.allclose(out_small, ref_small, atol=1e-5, rtol=1e-5)

    # A larger, non-tile-aligned batch to exercise the grid + padding path.
    x_big = jax.random.normal(k_x2, (300, 8), dtype=jnp.float32)
    out_big = jax.block_until_ready(ann_forward(x_big, params, tb=128))
    ref_big = ann_forward_ref(x_big, params)
    assert out_big.shape == (300, 1)
    assert jnp.allclose(out_big, ref_big, atol=1e-5, rtol=1e-5)

    print("KERNEL_OK")
</pallas_src>

<mosaic_0001>
module attributes {stable_mosaic.version = 11 : i64} {
  func.func @_ann_kernel(%arg0: i32, %arg1: memref<8x128xf32, #tpu.memory_space<vmem>>, %arg2: memref<16x8xf32, #tpu.memory_space<vmem>>, %arg3: memref<16x1xf32, #tpu.memory_space<vmem>>, %arg4: memref<16x16xf32, #tpu.memory_space<vmem>>, %arg5: memref<16x1xf32, #tpu.memory_space<vmem>>, %arg6: memref<1x16xf32, #tpu.memory_space<vmem>>, %arg7: memref<1x1xf32, #tpu.memory_space<smem>>, %arg8: memref<1x128xf32, #tpu.memory_space<vmem>>) attributes {dimension_semantics = [#tpu.dimension_semantics<parallel>], iteration_bounds = array<i64: 1>, scalar_prefetch = 0 : i64, scratch_operands = 0 : i64, tpu.core_type = #tpu.core_type<tc>, window_params = [{transform_indices = @transform_0, window_bounds = array<i64: 8, 128>}, {pipeline_mode = #tpu.pipeline_mode<synchronous>, transform_indices = @transform_1, window_bounds = array<i64: 16, 8>}, {pipeline_mode = #tpu.pipeline_mode<synchronous>, transform_indices = @transform_2, window_bounds = array<i64: 16, 1>}, {pipeline_mode = #tpu.pipeline_mode<synchronous>, transform_indices = @transform_3, window_bounds = array<i64: 16, 16>}, {pipeline_mode = #tpu.pipeline_mode<synchronous>, transform_indices = @transform_4, window_bounds = array<i64: 16, 1>}, {pipeline_mode = #tpu.pipeline_mode<synchronous>, transform_indices = @transform_5, window_bounds = array<i64: 1, 16>}, {transform_indices = @transform_6, window_bounds = array<i64: 1, 1>}, {transform_indices = @transform_7, window_bounds = array<i64: 1, 128>}]} {
    %c0 = arith.constant 0 : index
    %c0_0 = arith.constant 0 : index
    %0 = vector.load %arg1[%c0, %c0_0] : memref<8x128xf32, #tpu.memory_space<vmem>>, vector<8x128xf32>
    %c0_1 = arith.constant 0 : index
    %c0_2 = arith.constant 0 : index
    %1 = vector.load %arg2[%c0_1, %c0_2] : memref<16x8xf32, #tpu.memory_space<vmem>>, vector<16x8xf32>
    %cst = arith.constant dense<0.000000e+00> : vector<16x128xf32>
    %2 = tpu.matmul %1, %0, %cst {dimension_numbers = #tpu.dot_dimension_numbers<[1], [0], [0], [1], [0, 0, 1, 1], [], []>} : vector<16x8xf32>, vector<8x128xf32>, vector<16x128xf32> -> vector<16x128xf32>
    %c0_3 = arith.constant 0 : index
    %c0_4 = arith.constant 0 : index
    %3 = vector.load %arg3[%c0_3, %c0_4] : memref<16x1xf32, #tpu.memory_space<vmem>>, vector<16x1xf32>
    %4 = vector.broadcast %3 : vector<16x1xf32> to vector<16x128xf32>
    %5 = arith.addf %2, %4 : vector<16x128xf32>
    %cst_5 = arith.constant 0.000000e+00 : f32
    %6 = vector.broadcast %cst_5 : f32 to vector<16x128xf32>
    %7 = arith.maximumf %5, %6 : vector<16x128xf32>
    %c0_6 = arith.constant 0 : index
    %c0_7 = arith.constant 0 : index
    %8 = vector.load %arg4[%c0_6, %c0_7] : memref<16x16xf32, #tpu.memory_space<vmem>>, vector<16x16xf32>
    %cst_8 = arith.constant dense<0.000000e+00> : vector<16x128xf32>
    %9 = tpu.matmul %8, %7, %cst_8 {dimension_numbers = #tpu.dot_dimension_numbers<[1], [0], [0], [1], [0, 0, 1, 1], [], []>} : vector<16x16xf32>, vector<16x128xf32>, vector<16x128xf32> -> vector<16x128xf32>
    %c0_9 = arith.constant 0 : index
    %c0_10 = arith.constant 0 : index
    %10 = vector.load %arg5[%c0_9, %c0_10] : memref<16x1xf32, #tpu.memory_space<vmem>>, vector<16x1xf32>
    %11 = vector.broadcast %10 : vector<16x1xf32> to vector<16x128xf32>
    %12 = arith.addf %9, %11 : vector<16x128xf32>
    %cst_11 = arith.constant 0.000000e+00 : f32
    %13 = vector.broadcast %cst_11 : f32 to vector<16x128xf32>
    %14 = arith.maximumf %12, %13 : vector<16x128xf32>
    %c0_12 = arith.constant 0 : index
    %c0_13 = arith.constant 0 : index
    %15 = vector.load %arg6[%c0_12, %c0_13] : memref<1x16xf32, #tpu.memory_space<vmem>>, vector<1x16xf32>
    %cst_14 = arith.constant dense<0.000000e+00> : vector<1x128xf32>
    %16 = tpu.matmul %15, %14, %cst_14 {dimension_numbers = #tpu.dot_dimension_numbers<[1], [0], [0], [1], [0, 0, 1, 1], [], []>} : vector<1x16xf32>, vector<16x128xf32>, vector<1x128xf32> -> vector<1x128xf32>
    %c0_15 = arith.constant 0 : index
    %c0_16 = arith.constant 0 : index
    %17 = memref.load %arg7[%c0_15, %c0_16] : memref<1x1xf32, #tpu.memory_space<smem>>
    %18 = vector.broadcast %17 : f32 to vector<1x128xf32>
    %19 = arith.addf %16, %18 : vector<1x128xf32>
    %20 = math.absf %19 : vector<1x128xf32>
    %cst_17 = arith.constant 0.000000e+00 : f32
    %21 = vector.broadcast %cst_17 : f32 to vector<1x128xf32>
    %22 = arith.subf %21, %20 : vector<1x128xf32>
    %23 = math.exp %22 : vector<1x128xf32>
    %cst_18 = arith.constant 0.000000e+00 : f32
    %24 = vector.broadcast %cst_18 : f32 to vector<1x128xf32>
    %25 = arith.cmpf oge, %19, %24 : vector<1x128xf32>
    %cst_19 = arith.constant 1.000000e+00 : f32
    %26 = vector.broadcast %cst_19 : f32 to vector<1x128xf32>
    %27 = arith.addf %26, %23 : vector<1x128xf32>
    %cst_20 = arith.constant 1.000000e+00 : f32
    %28 = vector.broadcast %cst_20 : f32 to vector<1x128xf32>
    %29 = arith.divf %28, %27 : vector<1x128xf32>
    %cst_21 = arith.constant 1.000000e+00 : f32
    %30 = vector.broadcast %cst_21 : f32 to vector<1x128xf32>
    %31 = arith.addf %30, %23 : vector<1x128xf32>
    %32 = arith.divf %23, %31 : vector<1x128xf32>
    %33 = arith.select %25, %29, %32 : vector<1x128xi1>, vector<1x128xf32>
    %c0_22 = arith.constant 0 : index
    %c0_23 = arith.constant 0 : index
    %34 = vector.load %arg8[%c0_22, %c0_23] : memref<1x128xf32, #tpu.memory_space<vmem>>, vector<1x128xf32>
    tpu.vector_store %arg8[%c0_22, %c0_23], %33 {strides = array<i32>} : memref<1x128xf32, #tpu.memory_space<vmem>>, vector<1x128xf32>,
    return
  }
  func.func @transform_0(%arg0: i32) -> (i32, i32) {
    %c0_i32 = arith.constant 0 : i32
    %c0_i32_0 = arith.constant 0 : i32
    return %c0_i32, %arg0 : i32, i32
  }
  func.func @transform_1(%arg0: i32) -> (i32, i32) {
    %c0_i32 = arith.constant 0 : i32
    %c0_i32_0 = arith.constant 0 : i32
    %c0_i32_1 = arith.constant 0 : i32
    return %c0_i32, %c0_i32_0 : i32, i32
  }
  func.func @transform_2(%arg0: i32) -> (i32, i32) {
    %c0_i32 = arith.constant 0 : i32
    %c0_i32_0 = arith.constant 0 : i32
    %c0_i32_1 = arith.constant 0 : i32
    return %c0_i32, %c0_i32_0 : i32, i32
  }
  func.func @transform_3(%arg0: i32) -> (i32, i32) {
    %c0_i32 = arith.constant 0 : i32
    %c0_i32_0 = arith.constant 0 : i32
    %c0_i32_1 = arith.constant 0 : i32
    return %c0_i32, %c0_i32_0 : i32, i32
  }
  func.func @transform_4(%arg0: i32) -> (i32, i32) {
    %c0_i32 = arith.constant 0 : i32
    %c0_i32_0 = arith.constant 0 : i32
    %c0_i32_1 = arith.constant 0 : i32
    return %c0_i32, %c0_i32_0 : i32, i32
  }
  func.func @transform_5(%arg0: i32) -> (i32, i32) {
    %c0_i32 = arith.constant 0 : i32
    %c0_i32_0 = arith.constant 0 : i32
    %c0_i32_1 = arith.constant 0 : i32
    return %c0_i32, %c0_i32_0 : i32, i32
  }
  func.func @transform_6(%arg0: i32) -> (i32, i32) {
    %c0_i32 = arith.constant 0 : i32
    %c0_i32_0 = arith.constant 0 : i32
    %c0_i32_1 = arith.constant 0 : i32
    return %c0_i32, %c0_i32_0 : i32, i32
  }
  func.func @transform_7(%arg0: i32) -> (i32, i32) {
    %c0_i32 = arith.constant 0 : i32
    %c0_i32_0 = arith.constant 0 : i32
    return %c0_i32, %arg0 : i32, i32
  }
}

</mosaic_0001>

<llo_original>
// kernel: ann_forward.1
$region0: #{ann_forward.1}
  #allocation0 [shape = 'u32[]', space=smem, size = 0x4, offset = 0x4, fixed_abs, tag = 'smem constant byte address 0x4 - core index']
  #allocation1 [shape = 'u32[72,128]{1,0:T(1,128)}', space=vmem, size = 0x9000, scoped, tag = 'internal scratch']
  #allocation2 [shape = 'f32[1,1]{1,0:T(1,128)S(6)}', space=smem, size = 0x200, scoped, tag = 'scoped memory for ann_forward.1']
  %s0 = inlined_call_operand.vmem [shape: f32[8,128], index: 0, kind: input, shape index: {}]
  %s1 = inlined_call_operand.vmem [shape: f32[16,8], index: 1, kind: input, shape index: {}]
  %s2 = inlined_call_operand.vmem [shape: f32[16,1], index: 2, kind: input, shape index: {}]
  %s3 = inlined_call_operand.vmem [shape: f32[16,16], index: 3, kind: input, shape index: {}]
  %s4 = inlined_call_operand.vmem [shape: f32[16,1], index: 4, kind: input, shape index: {}]
  %s5 = inlined_call_operand.vmem [shape: f32[1,16], index: 5, kind: input, shape index: {}]
  %s6 = inlined_call_operand.<no memory space> [shape: f32[1,1], index: 6, kind: input, shape index: {}]
  %s7 = inlined_call_operand.vmem [shape: f32[1,128], index: 7, kind: output, shape index: {}]
  %s8 = sld [smem:[#allocation0]]
  $region38: #{ann_forward.1} parent=0
    _
  %s10 = ssub.s32 1, %s8
  %s11 = scalar_select 0, %s10, %s8
  %12 = sst [smem:[#allocation2]] %s6
  // Predicated region
  $region2: #{ann_forward.1} parent=0 // pred_check
    _
  $region3: #{ann_forward.1} parent=0 // pred_check_branch
    %14 = sbr.rel (0) target = $region5
  $region4: #{ann_forward.1} parent=0 // pred_region
    _
  $region5: #{ann_forward.1} parent=0 // pred_fallthru
    _
  // Predicated region
  $region6: #{ann_forward.1} parent=0 // pred_check
    _
  $region7: #{ann_forward.1} parent=0 // pred_check_branch
    %16 = sbr.rel (0) target = $region9
  $region8: #{ann_forward.1} parent=0 // pred_region
    _
  $region9: #{ann_forward.1} parent=0 // pred_fallthru
    _
  // Predicated region
  $region10: #{ann_forward.1} parent=0 // pred_check
    _
  $region11: #{ann_forward.1} parent=0 // pred_check_branch
    %18 = sbr.rel (0) target = $region13
  $region12: #{ann_forward.1} parent=0 // pred_region
    _
  $region13: #{ann_forward.1} parent=0 // pred_fallthru
    _
  // Predicated region
  $region14: #{ann_forward.1} parent=0 // pred_check
    _
  $region15: #{ann_forward.1} parent=0 // pred_check_branch
    %20 = sbr.rel (0) target = $region17
  $region16: #{ann_forward.1} parent=0 // pred_region
    _
  $region17: #{ann_forward.1} parent=0 // pred_fallthru
    _
  // Predicated region
  $region18: #{ann_forward.1} parent=0 // pred_check
    _
  $region19: #{ann_forward.1} parent=0 // pred_check_branch
    %22 = sbr.rel (0) target = $region21
  $region20: #{ann_forward.1} parent=0 // pred_region
    _
  $region21: #{ann_forward.1} parent=0 // pred_fallthru
    _
  // Predicated region
  $region22: #{ann_forward.1} parent=0 // pred_check
    _
  $region23: #{ann_forward.1} parent=0 // pred_check_branch
    %24 = sbr.rel (0) target = $region25
  $region24: #{ann_forward.1} parent=0 // pred_region
    _
  $region25: #{ann_forward.1} parent=0 // pred_fallthru
    _
  // Predicated region
  $region26: #{ann_forward.1} parent=0 // pred_check
    _
  $region27: #{ann_forward.1} parent=0 // pred_check_branch
    %26 = sbr.rel (0) target = $region29
  $region28: #{ann_forward.1} parent=0 // pred_region
    _
  $region29: #{ann_forward.1} parent=0 // pred_fallthru
    _
  %v27 = vld [vmem:[%s0] sm:$0xff]
  %v28 = vld [vmem:[%s1] sm:$0xff]
  %v29 = vld [vmem:[%s1 + $0x8] sm:$0xff]
  %v30 = vld [vmem:[%s2] sm:$0xff]
  %v31 = vld [vmem:[%s2 + $0x8] sm:$0xff]
  %33 = vset.pattern.permute.xlu0 0
  %34 = vperm.xlu0 %33, %v30
  %v35 = vpop.permute.xlu0 %34
  %38 = vset.pattern.permute.xlu0 0
  %39 = vperm.xlu0 %38, %v31
  %v40 = vpop.permute.xlu0 %39
  %vm42 = vcmask 64512
  %v44 = vsel %vm42, %v28, 0
  %v47 = vsel %vm42, %v29, 0
  %49 = vmatpush.msra.mxu0 0.0
  %50 = vmatpush.msra.mxu0 0.0
  %51 = vmatpush.msra.mxu0 0.0
  %52 = vmatpush.msra.mxu0 0.0
  %53 = vmatpush.msra.mxu0 0.0
  %54 = vmatpush.msra.mxu0 0.0
  %55 = vmatpush.msra.mxu0 0.0
  %56 = vmatpush.msra.mxu0 0.0
  %57 = vmatpush.msra.mxu0 0.0
  %58 = vmatpush.msra.mxu0 0.0
  %59 = vmatpush.msra.mxu0 0.0
  %60 = vmatpush.msra.mxu0 0.0
  %61 = vmatpush.msra.mxu0 0.0
  %62 = vmatpush.msra.mxu0 0.0
  %63 = vmatpush.msra.mxu0 0.0
  %64 = vmatpush.msra.mxu0 %v27
  %65 = vmatmul.f32.gmra.mxu0 %v44
  %v66 = vpop.f32.mrf.mxu0
  %v67 = vadd.f32 %v35, %v66
  %68 = vmatmul.f32.gmra.mxu0 %v47
  %v69 = vpop.f32.mrf.mxu0
  %v70 = vadd.f32 %v40, %v69
  %71 = vdwg.mxu0
  %v72 = vmax.f32 %v67, 0.0
  %v73 = vmax.f32 %v70, 0.0
  %v74 = vld [vmem:[%s3] sm:$0xff]
  %v75 = vld [vmem:[%s3 + $0x8] sm:$0xff]
  %v76 = vld [vmem:[%s4] sm:$0xff]
  %v77 = vld [vmem:[%s4 + $0x8] sm:$0xff]
  %79 = vset.pattern.permute.xlu0 0
  %80 = vperm.xlu0 %79, %v76
  %v81 = vpop.permute.xlu0 %80
  %84 = vset.pattern.permute.xlu0 0
  %85 = vperm.xlu0 %84, %v77
  %v86 = vpop.permute.xlu0 %85
  %vm88 = vcmask 130048
  %v90 = vsel %vm88, %v74, 0
  %v93 = vsel %vm88, %v75, 0
  %95 = vmatpush.msra.mxu0 0.0
  %96 = vmatpush.msra.mxu0 0.0
  %97 = vmatpush.msra.mxu0 0.0
  %98 = vmatpush.msra.mxu0 0.0
  %99 = vmatpush.msra.mxu0 0.0
  %100 = vmatpush.msra.mxu0 0.0
  %101 = vmatpush.msra.mxu0 0.0
  %102 = vmatpush.msra.mxu0 0.0
  %103 = vmatpush.msra.mxu0 0.0
  %104 = vmatpush.msra.mxu0 0.0
  %105 = vmatpush.msra.mxu0 0.0
  %106 = vmatpush.msra.mxu0 0.0
  %107 = vmatpush.msra.mxu0 0.0
  %108 = vmatpush.msra.mxu0 0.0
  %109 = vmatpush.msra.mxu0 %v73
  %110 = vmatpush.msra.mxu0 %v72
  %111 = vmatmul.f32.gmra.mxu0 %v90
  %v112 = vpop.f32.mrf.mxu0
  %v113 = vadd.f32 %v81, %v112
  %114 = vmatmul.f32.gmra.mxu0 %v93
  %v115 = vpop.f32.mrf.mxu0
  %v116 = vadd.f32 %v86, %v115
  %117 = vdwg.mxu0
  %v118 = vmax.f32 %v113, 0.0
  %v119 = vmax.f32 %v116, 0.0
  %v120 = vld [vmem:[%s5] sm:$0x1]
  %s121 = sld [smem:[#allocation2]]
  %v122 = vstv %s121
  %v124 = vsel %vm88, %v120, 0
  %126 = vmatpush.msra.mxu0 0.0
  %127 = vmatpush.msra.mxu0 0.0
  %128 = vmatpush.msra.mxu0 0.0
  %129 = vmatpush.msra.mxu0 0.0
  %130 = vmatpush.msra.mxu0 0.0
  %131 = vmatpush.msra.mxu0 0.0
  %132 = vmatpush.msra.mxu0 0.0
  %133 = vmatpush.msra.mxu0 0.0
  %134 = vmatpush.msra.mxu0 0.0
  %135 = vmatpush.msra.mxu0 0.0
  %136 = vmatpush.msra.mxu0 0.0
  %137 = vmatpush.msra.mxu0 0.0
  %138 = vmatpush.msra.mxu0 0.0
  %139 = vmatpush.msra.mxu0 0.0
  %140 = vmatpush.msra.mxu0 %v119
  %141 = vmatpush.msra.mxu0 %v118
  %142 = vmatmul.f32.gmra.mxu0 %v124
  %v143 = vpop.f32.mrf.mxu0
  %v144 = vadd.f32 %v122, %v143
  %145 = vdwg.mxu0
  %v146 = vand.u32 2147483647, %v144
  %v147 = vsub.f32 0.0, %v146
  %v148 = vmul.f32 %v147, 1.442695
  %v149 = vpow.pop %v148
  %vm150 = vcmp.ge.f32.partialorder %v144, 0.0
  %v151 = vadd.f32 %v149, 1.0
  %v152 = vrcp.pop %v151
  %v153 = vmul.f32 %v151, %v152
  %v154 = vsub.f32 1.0, %v153
  %v155 = vmul.f32 %v152, %v154
  %v156 = vadd.f32 %v152, %v155
  %vm157 = vweird.f32 %v151
  %vm158 = vweird.f32 %v152
  %vm159 = vmor %vm157, %vm158
  %v160 = vsel %vm159, %v152, %v156
  %v161 = vand.u32 2147483647, %v151
  %vm162 = vcmp.eq.f32.partialorder %v161, 8.507059e+37
  %v163 = vand.u32 %v151, 2147483648
  %v164 = vor.u32 1.1754944e-38, %v163
  %v165 = vsel %vm162, %v164, %v160
  %v166 = vmul.f32 1.0, %v165
  %v167 = vmul.f32 %v149, %v165
  %v168 = vsel %vm150, %v166, %v167
  %169 = vst [vmem:[%s7] sm:$0x1] %v168
  // Predicated region
  $region30: #{ann_forward.1} parent=0 // pred_check
    _
  $region31: #{ann_forward.1} parent=0 // pred_check_branch
    %171 = sbr.rel (0) target = $region33
  $region32: #{ann_forward.1} parent=0 // pred_region
    _
  $region33: #{ann_forward.1} parent=0 // pred_fallthru
    _
  // Predicated region
  $region34: #{ann_forward.1} parent=0 // pred_check
    _
  $region35: #{ann_forward.1} parent=0 // pred_check_branch
    %173 = sbr.rel (0) target = $region37
  $region36: #{ann_forward.1} parent=0 // pred_region
    _
  $region37: #{ann_forward.1} parent=0 // pred_fallthru
    _

</llo_original>
